<compile_context>
chip_gen: v6e
topology: v6e:2x2x1
jax: 0.10.0
libtpu: 0.0.40
codegen_flags: <defaults>
</compile_context>

<pallas_src>
import jax
import jax.numpy as jnp
from jax.experimental import pallas as pl
from jax.experimental.pallas import tpu as pltpu

LANE = 128  # lane width; pad the output feature dim up to this


def dqn_kernel(x_ref, w1_ref, b1_ref, w2_ref, b2_ref, w3_ref, b3_ref, o_ref):
    # layer 1: Linear(in -> 128) + ReLU
    h1 = jnp.dot(x_ref[...], w1_ref[...], preferred_element_type=jnp.float32)
    h1 = jnp.maximum(h1 + b1_ref[...], 0.0)
    # layer 2: Linear(128 -> 256) + ReLU
    h2 = jnp.dot(h1, w2_ref[...], preferred_element_type=jnp.float32)
    h2 = jnp.maximum(h2 + b2_ref[...], 0.0)
    # layer 3: Linear(256 -> out_pad)  (no activation; q-values)
    h3 = jnp.dot(h2, w3_ref[...], preferred_element_type=jnp.float32)
    o_ref[...] = (h3 + b3_ref[...]).astype(o_ref.dtype)


def dqn_forward(state, params, output_dim):
    """state: [B, input_dim] float32. params: dict w1,b1,w2,b2,w3,b3 (w3/b3 lane-padded)."""
    B, in_dim = state.shape
    out_pad = params["w3"].shape[1]  # == LANE-padded output dim

    # Batch tile: large tiles amortize per-step overhead; small batches get a
    # single tile rounded up to a sublane multiple of 8.
    TB = 256 if B >= 256 else max(8, ((B + 7) // 8) * 8)
    Bp = ((B + TB - 1) // TB) * TB
    if Bp != B:
        state = jnp.pad(state, ((0, Bp - B), (0, 0)))

    # Weights/biases: whole-array blocks, constant index map -> resident in VMEM.
    resident = lambda a: pl.BlockSpec(a.shape, lambda i: (0,) * a.ndim)

    args = (state, params["w1"], params["b1"], params["w2"], params["b2"],
            params["w3"], params["b3"])

    out = pl.pallas_call(
        dqn_kernel,
        out_shape=jax.ShapeDtypeStruct((Bp, out_pad), jnp.float32),
        grid=(Bp // TB,),
        in_specs=[pl.BlockSpec((TB, in_dim), lambda i: (i, 0))]
                 + [resident(a) for a in args[1:]],
        out_specs=pl.BlockSpec((TB, out_pad), lambda i: (i, 0)),
        compiler_params=pltpu.CompilerParams(
            dimension_semantics=("parallel",)),
    )(*args)
    return out[:B, :output_dim]


def init_dqn_params(key, input_dim, output_dim):
    """Mimics nn.Linear default init (uniform(-1/sqrt(fan_in), +1/sqrt(fan_in))).

    Weights stored [in, out]; last layer padded to LANE columns with zeros so
    the kernel's output stores are lane-dense.
    """
    def linear(k, fan_in, fan_out):
        kw, kb = jax.random.split(k)
        bound = 1.0 / jnp.sqrt(fan_in)
        w = jax.random.uniform(kw, (fan_in, fan_out), jnp.float32, -bound, bound)
        b = jax.random.uniform(kb, (1, fan_out), jnp.float32, -bound, bound)
        return w, b

    k1, k2, k3 = jax.random.split(key, 3)
    w1, b1 = linear(k1, input_dim, 128)
    w2, b2 = linear(k2, 128, 256)
    w3, b3 = linear(k3, 256, output_dim)

    # lane-dense padding of the final layer (zeros do not change q-values)
    out_pad = max(LANE, ((output_dim + LANE - 1) // LANE) * LANE)
    w3p = jnp.zeros((256, out_pad), jnp.float32).at[:, :output_dim].set(w3)
    b3p = jnp.zeros((1, out_pad), jnp.float32).at[:, :output_dim].set(b3)

    return {"w1": w1, "b1": b1, "w2": w2, "b2": b2, "w3": w3p, "b3": b3p}, (w3, b3)


if __name__ == "__main__":
    key = jax.random.PRNGKey(0)
    input_dim, output_dim, batch = 32, 4, 8  # small shapes; kernel scales with B

    kp, kx = jax.random.split(key)
    params, (w3_raw, b3_raw) = init_dqn_params(kp, input_dim, output_dim)
    state = jax.random.normal(kx, (batch, input_dim), jnp.float32)

    qvals = dqn_forward(state, params, output_dim)
    jax.block_until_ready(qvals)

    # pure-JAX reference (unpadded weights)
    ref = jnp.maximum(state @ params["w1"] + params["b1"], 0.0)
    ref = jnp.maximum(ref @ params["w2"] + params["b2"], 0.0)
    ref = ref @ w3_raw + b3_raw

    assert qvals.shape == (batch, output_dim)
    assert jnp.allclose(qvals, ref, atol=1e-5, rtol=1e-5)

    print("KERNEL_OK")
</pallas_src>

<mosaic_0001>
module attributes {stable_mosaic.version = 11 : i64} {
  func.func @dqn_kernel(%arg0: i32, %arg1: memref<8x32xf32, #tpu.memory_space<vmem>>, %arg2: memref<32x128xf32, #tpu.memory_space<vmem>>, %arg3: memref<1x128xf32, #tpu.memory_space<vmem>>, %arg4: memref<128x256xf32, #tpu.memory_space<vmem>>, %arg5: memref<1x256xf32, #tpu.memory_space<vmem>>, %arg6: memref<256x128xf32, #tpu.memory_space<vmem>>, %arg7: memref<1x128xf32, #tpu.memory_space<vmem>>, %arg8: memref<8x128xf32, #tpu.memory_space<vmem>>) attributes {dimension_semantics = [#tpu.dimension_semantics<parallel>], iteration_bounds = array<i64: 1>, scalar_prefetch = 0 : i64, scratch_operands = 0 : i64, tpu.core_type = #tpu.core_type<tc>, window_params = [{transform_indices = @transform_0, window_bounds = array<i64: 8, 32>}, {pipeline_mode = #tpu.pipeline_mode<synchronous>, transform_indices = @transform_1, window_bounds = array<i64: 32, 128>}, {pipeline_mode = #tpu.pipeline_mode<synchronous>, transform_indices = @transform_2, window_bounds = array<i64: 1, 128>}, {pipeline_mode = #tpu.pipeline_mode<synchronous>, transform_indices = @transform_3, window_bounds = array<i64: 128, 256>}, {pipeline_mode = #tpu.pipeline_mode<synchronous>, transform_indices = @transform_4, window_bounds = array<i64: 1, 256>}, {pipeline_mode = #tpu.pipeline_mode<synchronous>, transform_indices = @transform_5, window_bounds = array<i64: 256, 128>}, {pipeline_mode = #tpu.pipeline_mode<synchronous>, transform_indices = @transform_6, window_bounds = array<i64: 1, 128>}, {transform_indices = @transform_7, window_bounds = array<i64: 8, 128>}]} {
    %c0 = arith.constant 0 : index
    %c0_0 = arith.constant 0 : index
    %0 = vector.load %arg1[%c0, %c0_0] : memref<8x32xf32, #tpu.memory_space<vmem>>, vector<8x32xf32>
    %c0_1 = arith.constant 0 : index
    %c0_2 = arith.constant 0 : index
    %1 = vector.load %arg2[%c0_1, %c0_2] : memref<32x128xf32, #tpu.memory_space<vmem>>, vector<32x128xf32>
    %cst = arith.constant dense<0.000000e+00> : vector<8x128xf32>
    %2 = tpu.matmul %0, %1, %cst {dimension_numbers = #tpu.dot_dimension_numbers<[1], [0], [0], [1], [0, 0, 1, 1], [], []>} : vector<8x32xf32>, vector<32x128xf32>, vector<8x128xf32> -> vector<8x128xf32>
    %c0_3 = arith.constant 0 : index
    %c0_4 = arith.constant 0 : index
    %3 = vector.load %arg3[%c0_3, %c0_4] : memref<1x128xf32, #tpu.memory_space<vmem>>, vector<1x128xf32>
    %4 = vector.broadcast %3 : vector<1x128xf32> to vector<8x128xf32>
    %5 = arith.addf %2, %4 : vector<8x128xf32>
    %cst_5 = arith.constant 0.000000e+00 : f32
    %6 = vector.broadcast %cst_5 : f32 to vector<8x128xf32>
    %7 = arith.maximumf %5, %6 : vector<8x128xf32>
    %c0_6 = arith.constant 0 : index
    %c0_7 = arith.constant 0 : index
    %8 = vector.load %arg4[%c0_6, %c0_7] : memref<128x256xf32, #tpu.memory_space<vmem>>, vector<128x256xf32>
    %cst_8 = arith.constant dense<0.000000e+00> : vector<8x256xf32>
    %9 = tpu.matmul %7, %8, %cst_8 {dimension_numbers = #tpu.dot_dimension_numbers<[1], [0], [0], [1], [0, 0, 1, 1], [], []>} : vector<8x128xf32>, vector<128x256xf32>, vector<8x256xf32> -> vector<8x256xf32>
    %c0_9 = arith.constant 0 : index
    %c0_10 = arith.constant 0 : index
    %10 = vector.load %arg5[%c0_9, %c0_10] : memref<1x256xf32, #tpu.memory_space<vmem>>, vector<1x256xf32>
    %11 = vector.broadcast %10 : vector<1x256xf32> to vector<8x256xf32>
    %12 = arith.addf %9, %11 : vector<8x256xf32>
    %cst_11 = arith.constant 0.000000e+00 : f32
    %13 = vector.broadcast %cst_11 : f32 to vector<8x256xf32>
    %14 = arith.maximumf %12, %13 : vector<8x256xf32>
    %c0_12 = arith.constant 0 : index
    %c0_13 = arith.constant 0 : index
    %15 = vector.load %arg6[%c0_12, %c0_13] : memref<256x128xf32, #tpu.memory_space<vmem>>, vector<256x128xf32>
    %cst_14 = arith.constant dense<0.000000e+00> : vector<8x128xf32>
    %16 = tpu.matmul %14, %15, %cst_14 {dimension_numbers = #tpu.dot_dimension_numbers<[1], [0], [0], [1], [0, 0, 1, 1], [], []>} : vector<8x256xf32>, vector<256x128xf32>, vector<8x128xf32> -> vector<8x128xf32>
    %c0_15 = arith.constant 0 : index
    %c0_16 = arith.constant 0 : index
    %17 = vector.load %arg7[%c0_15, %c0_16] : memref<1x128xf32, #tpu.memory_space<vmem>>, vector<1x128xf32>
    %18 = vector.broadcast %17 : vector<1x128xf32> to vector<8x128xf32>
    %19 = arith.addf %16, %18 : vector<8x128xf32>
    %c0_17 = arith.constant 0 : index
    %c0_18 = arith.constant 0 : index
    %20 = vector.load %arg8[%c0_17, %c0_18] : memref<8x128xf32, #tpu.memory_space<vmem>>, vector<8x128xf32>
    tpu.vector_store %arg8[%c0_17, %c0_18], %19 {strides = array<i32>} : memref<8x128xf32, #tpu.memory_space<vmem>>, vector<8x128xf32>,
    return
  }
  func.func @transform_0(%arg0: i32) -> (i32, i32) {
    %c0_i32 = arith.constant 0 : i32
    %c0_i32_0 = arith.constant 0 : i32
    return %arg0, %c0_i32 : i32, i32
  }
  func.func @transform_1(%arg0: i32) -> (i32, i32) {
    %c0_i32 = arith.constant 0 : i32
    %c0_i32_0 = arith.constant 0 : i32
    %c0_i32_1 = arith.constant 0 : i32
    return %c0_i32, %c0_i32_0 : i32, i32
  }
  func.func @transform_2(%arg0: i32) -> (i32, i32) {
    %c0_i32 = arith.constant 0 : i32
    %c0_i32_0 = arith.constant 0 : i32
    %c0_i32_1 = arith.constant 0 : i32
    return %c0_i32, %c0_i32_0 : i32, i32
  }
  func.func @transform_3(%arg0: i32) -> (i32, i32) {
    %c0_i32 = arith.constant 0 : i32
    %c0_i32_0 = arith.constant 0 : i32
    %c0_i32_1 = arith.constant 0 : i32
    return %c0_i32, %c0_i32_0 : i32, i32
  }
  func.func @transform_4(%arg0: i32) -> (i32, i32) {
    %c0_i32 = arith.constant 0 : i32
    %c0_i32_0 = arith.constant 0 : i32
    %c0_i32_1 = arith.constant 0 : i32
    return %c0_i32, %c0_i32_0 : i32, i32
  }
  func.func @transform_5(%arg0: i32) -> (i32, i32) {
    %c0_i32 = arith.constant 0 : i32
    %c0_i32_0 = arith.constant 0 : i32
    %c0_i32_1 = arith.constant 0 : i32
    return %c0_i32, %c0_i32_0 : i32, i32
  }
  func.func @transform_6(%arg0: i32) -> (i32, i32) {
    %c0_i32 = arith.constant 0 : i32
    %c0_i32_0 = arith.constant 0 : i32
    %c0_i32_1 = arith.constant 0 : i32
    return %c0_i32, %c0_i32_0 : i32, i32
  }
  func.func @transform_7(%arg0: i32) -> (i32, i32) {
    %c0_i32 = arith.constant 0 : i32
    %c0_i32_0 = arith.constant 0 : i32
    return %arg0, %c0_i32 : i32, i32
  }
}

</mosaic_0001>

<llo_original>
// kernel: tpu_custom_call.1
$region0: #{tpu_custom_call.1}
  #allocation0 [shape = 'u32[]', space=smem, size = 0x4, offset = 0x4, fixed_abs, tag = 'smem constant byte address 0x4 - core index']
  #allocation1 [shape = 'u32[144,128]{1,0:T(1,128)}', space=vmem, size = 0x12000, scoped, tag = 'internal scratch']
  %s0 = inlined_call_operand.hbm [shape: f32[8,32], index: 0, kind: input, shape index: {}]
  %s1 = inlined_call_operand.hbm [shape: f32[32,128], index: 1, kind: input, shape index: {}]
  %s2 = inlined_call_operand.vmem [shape: f32[1,128], index: 2, kind: input, shape index: {}]
  %s3 = inlined_call_operand.hbm [shape: f32[128,256], index: 3, kind: input, shape index: {}]
  %s4 = inlined_call_operand.vmem [shape: f32[1,256], index: 4, kind: input, shape index: {}]
  %s5 = inlined_call_operand.hbm [shape: f32[256,128], index: 5, kind: input, shape index: {}]
  %s6 = inlined_call_operand.vmem [shape: f32[1,128], index: 6, kind: input, shape index: {}]
  %s7 = inlined_call_operand.hbm [shape: f32[8,128], index: 7, kind: output, shape index: {}]
  %s8 = sld [smem:[#allocation0]]
  $region54: #{tpu_custom_call.1} parent=0
    _
  %s10 = ssub.s32 1, %s8
  %s11 = scalar_select 0, %s10, %s8
  $region1: #{tpu_custom_call.1} parent=0
    #allocation2 [shape = 'u8[4096]{0}', space=vmem, size = 0x1000, scoped, tag = 'input window, operand 0, single buffered']
    #allocation3 [shape = 's32[1]{0}', space=sflag, size = 0x4, scoped, tag = 'scoped memory for tpu_custom_call.1']
    #allocation4 [shape = 's32[1]{0}', space=sflag, size = 0x4, scoped, tag = 'scoped memory for tpu_custom_call.1']
    #allocation5 [shape = 'u8[16384]{0}', space=vmem, size = 0x4000, scoped, tag = 'input window, operand 1, single buffered']
    #allocation6 [shape = 's32[1]{0}', space=sflag, size = 0x4, scoped, tag = 'scoped memory for tpu_custom_call.1']
    #allocation7 [shape = 'u8[131072]{0}', space=vmem, size = 0x20000, scoped, tag = 'input window, operand 3, single buffered']
    #allocation8 [shape = 'u8[131072]{0}', space=vmem, size = 0x20000, scoped, tag = 'input window, operand 5, single buffered']
    #allocation9 [shape = 's32[1]{0}', space=sflag, size = 0x4, scoped, tag = 'scoped memory for tpu_custom_call.1']
    #allocation10 [shape = 'u8[4096]{0}', space=vmem, size = 0x1000, scoped, tag = 'output window, operand 0, single buffered']
    %12 = vsyncpa [#allocation3], 0
    %13 = vsyncpa [#allocation6], 0
    %14 = vsyncpa [#allocation9], 0
    %15 = vsyncpa [#allocation4], 0
    // Predicated region
    $region2: #{tpu_custom_call.1} parent=1 // pred_check
      _
    $region3: #{tpu_custom_call.1} parent=1 // pred_check_branch
      %17 = sbr.rel (0) target = $region5
    $region4: #{tpu_custom_call.1} parent=1 // pred_region
      %s19 = ssub.s32 128, 128
      %20 = vsyncadd [#allocation3], %s19
      %s22 = sshll.u32 [#allocation2], 4
      %s23 = int_to_ptr.vmem [resolvable:$true] %s22
      %25 = dma.hbm_to_vmem [thread:$0]  %s0, 128, %s23, [#allocation3]
    $region5: #{tpu_custom_call.1} parent=1 // pred_fallthru
      _
    // Predicated region
    $region6: #{tpu_custom_call.1} parent=1 // pred_check
      _
    $region7: #{tpu_custom_call.1} parent=1 // pred_check_branch
      %27 = sbr.rel (0) target = $region9
    $region8: #{tpu_custom_call.1} parent=1 // pred_region
      %s29 = ssub.s32 512, 512
      %30 = vsyncadd [#allocation6], %s29
      %s31 = sshll.u32 [#allocation5], 4
      %s32 = int_to_ptr.vmem [resolvable:$true] %s31
      %37 = dma.hbm_to_vmem [thread:$0]  %s1, 512, %s32, [#allocation6], 128, 128, 8
    $region9: #{tpu_custom_call.1} parent=1 // pred_fallthru
      _
    // Predicated region
    $region10: #{tpu_custom_call.1} parent=1 // pred_check
      _
    $region11: #{tpu_custom_call.1} parent=1 // pred_check_branch
      %39 = sbr.rel (0) target = $region13
    $region12: #{tpu_custom_call.1} parent=1 // pred_region
      _
    $region13: #{tpu_custom_call.1} parent=1 // pred_fallthru
      _
    // Predicated region
    $region14: #{tpu_custom_call.1} parent=1 // pred_check
      _
    $region15: #{tpu_custom_call.1} parent=1 // pred_check_branch
      %41 = sbr.rel (0) target = $region17
    $region16: #{tpu_custom_call.1} parent=1 // pred_region
      %s43 = ssub.s32 4096, 4096
      %44 = vsyncadd [#allocation6], %s43
      %s45 = sshll.u32 [#allocation7], 4
      %s46 = int_to_ptr.vmem [resolvable:$true] %s45
      %51 = dma.hbm_to_vmem [thread:$0]  %s3, 4096, %s46, [#allocation6], 256, 256, 16
    $region17: #{tpu_custom_call.1} parent=1 // pred_fallthru
      _
    // Predicated region
    $region18: #{tpu_custom_call.1} parent=1 // pred_check
      _
    $region19: #{tpu_custom_call.1} parent=1 // pred_check_branch
      %53 = sbr.rel (0) target = $region21
    $region20: #{tpu_custom_call.1} parent=1 // pred_region
      _
    $region21: #{tpu_custom_call.1} parent=1 // pred_fallthru
      _
    // Predicated region
    $region22: #{tpu_custom_call.1} parent=1 // pred_check
      _
    $region23: #{tpu_custom_call.1} parent=1 // pred_check_branch
      %55 = sbr.rel (0) target = $region25
    $region24: #{tpu_custom_call.1} parent=1 // pred_region
      %s57 = ssub.s32 4096, 4096
      %58 = vsyncadd [#allocation9], %s57
      %s59 = sshll.u32 [#allocation8], 4
      %s60 = int_to_ptr.vmem [resolvable:$true] %s59
      %65 = dma.hbm_to_vmem [thread:$0]  %s5, 4096, %s60, [#allocation9], 128, 128, 8
    $region25: #{tpu_custom_call.1} parent=1 // pred_fallthru
      _
    // Predicated region
    $region26: #{tpu_custom_call.1} parent=1 // pred_check
      _
    $region27: #{tpu_custom_call.1} parent=1 // pred_check_branch
      %67 = sbr.rel (0) target = $region29
    $region28: #{tpu_custom_call.1} parent=1 // pred_region
      _
    $region29: #{tpu_custom_call.1} parent=1 // pred_fallthru
      _
    // Predicated region
    $region30: #{tpu_custom_call.1} parent=1 // pred_check
      _
    $region31: #{tpu_custom_call.1} parent=1 // pred_check_branch
      %69 = sbr.rel (0) target = $region33
    $region32: #{tpu_custom_call.1} parent=1 // pred_region
      %70 = dma.done [#allocation3], 128
    $region33: #{tpu_custom_call.1} parent=1 // pred_fallthru
      _
    // Predicated region
    $region34: #{tpu_custom_call.1} parent=1 // pred_check
      _
    $region35: #{tpu_custom_call.1} parent=1 // pred_check_branch
      %72 = sbr.rel (0) target = $region37
    $region36: #{tpu_custom_call.1} parent=1 // pred_region
      %73 = dma.done [#allocation6], 512
    $region37: #{tpu_custom_call.1} parent=1 // pred_fallthru
      _
    // Predicated region
    $region38: #{tpu_custom_call.1} parent=1 // pred_check
      _
    $region39: #{tpu_custom_call.1} parent=1 // pred_check_branch
      %75 = sbr.rel (0) target = $region41
    $region40: #{tpu_custom_call.1} parent=1 // pred_region
      %76 = dma.done [#allocation6], 4096
    $region41: #{tpu_custom_call.1} parent=1 // pred_fallthru
      _
    // Predicated region
    $region42: #{tpu_custom_call.1} parent=1 // pred_check
      _
    $region43: #{tpu_custom_call.1} parent=1 // pred_check_branch
      %78 = sbr.rel (0) target = $region45
    $region44: #{tpu_custom_call.1} parent=1 // pred_region
      %79 = dma.done [#allocation9], 4096
    $region45: #{tpu_custom_call.1} parent=1 // pred_fallthru
      _
    %v80 = vld [vmem:[#allocation2] sm:$0xff]
    %v81 = vld [vmem:[#allocation5] sm:$0xff]
    %v82 = vld [vmem:[#allocation5 + $0x8] sm:$0xff]
    %v83 = vld [vmem:[#allocation5 + $0x10] sm:$0xff]
    %v84 = vld [vmem:[#allocation5 + $0x18] sm:$0xff]
    %v85 = vld [vmem:[%s2] sm:$0x1]
    %v87 = vlaneseq
    %v88 = vshrl.u32 %v87, 7
    %v89 = vsub.s32 0, %v88
    %v90 = vrot.slane %v85, %v89
    %vm92 = vcmask 261120
    %v94 = vsel %vm92, %v80, 0
    %96 = vmatprep.subr.mxu0 0.0
    %97 = vmatpush1.msra.mxu0 0.0
    %98 = vmatprep.subr.mxu0 0.0
    %99 = vmatpush1.msra.mxu0 0.0
    %100 = vmatprep.subr.mxu0 0.0
    %101 = vmatpush1.msra.mxu0 0.0
    %102 = vmatprep.subr.mxu0 0.0
    %103 = vmatpush1.msra.mxu0 0.0
    %104 = vmatprep.subr.mxu0 0.0
    %105 = vmatpush1.msra.mxu0 0.0
    %106 = vmatprep.subr.mxu0 0.0
    %107 = vmatpush1.msra.mxu0 0.0
    %108 = vmatprep.subr.mxu0 0.0
    %109 = vmatpush1.msra.mxu0 0.0
    %110 = vmatprep.subr.mxu0 0.0
    %111 = vmatpush1.msra.mxu0 0.0
    %112 = vmatprep.subr.mxu0 0.0
    %113 = vmatpush1.msra.mxu0 0.0
    %114 = vmatprep.subr.mxu0 0.0
    %115 = vmatpush1.msra.mxu0 0.0
    %116 = vmatprep.subr.mxu0 0.0
    %117 = vmatpush1.msra.mxu0 0.0
    %118 = vmatprep.subr.mxu0 0.0
    %119 = vmatpush1.msra.mxu0 0.0
    %120 = vmatprep.subr.mxu0 0.0
    %121 = vmatpush1.msra.mxu0 %v84
    %122 = vmatprep.subr.mxu0 0.0
    %123 = vmatpush1.msra.mxu0 %v83
    %124 = vmatprep.subr.mxu0 0.0
    %125 = vmatpush1.msra.mxu0 %v82
    %126 = vmatprep.subr.mxu0 0.0
    %127 = vmatpush1.msra.mxu0 %v81
    %128 = vmatprep.subr.mxu0 0.0
    %129 = vmatpush2.msra.mxu0 0.0
    %130 = vmatprep.subr.mxu0 0.0
    %131 = vmatpush2.msra.mxu0 0.0
    %132 = vmatprep.subr.mxu0 0.0
    %133 = vmatpush2.msra.mxu0 0.0
    %134 = vmatprep.subr.mxu0 0.0
    %135 = vmatpush2.msra.mxu0 0.0
    %136 = vmatprep.subr.mxu0 0.0
    %137 = vmatpush2.msra.mxu0 0.0
    %138 = vmatprep.subr.mxu0 0.0
    %139 = vmatpush2.msra.mxu0 0.0
    %140 = vmatprep.subr.mxu0 0.0
    %141 = vmatpush2.msra.mxu0 0.0
    %142 = vmatprep.subr.mxu0 0.0
    %143 = vmatpush2.msra.mxu0 0.0
    %144 = vmatprep.subr.mxu0 0.0
    %145 = vmatpush2.msra.mxu0 0.0
    %146 = vmatprep.subr.mxu0 0.0
    %147 = vmatpush2.msra.mxu0 0.0
    %148 = vmatprep.subr.mxu0 0.0
    %149 = vmatpush2.msra.mxu0 0.0
    %150 = vmatprep.subr.mxu0 0.0
    %151 = vmatpush2.msra.mxu0 0.0
    %152 = vmatprep.subr.mxu0 0.0
    %153 = vmatpush2.msra.mxu0 0.0
    %154 = vmatprep.subr.mxu0 0.0
    %155 = vmatpush2.msra.mxu0 0.0
    %156 = vmatprep.subr.mxu0 0.0
    %157 = vmatpush2.msra.mxu0 0.0
    %158 = vmatprep.subr.mxu0 0.0
    %159 = vmatpush2.msra.mxu0 0.0
    %160 = vmatprep.mubr.f32.mxu0 0.0
    %161 = vmatmul.mubr.f32.gmra.mxu0 %v94
    %v162 = vpop.f32.mrf.mxu0
    %v163 = vadd.f32 %v90, %v162
    %v164 = vpop.f32.mrf.mxu0
    %165 = vdwg.mxu0
    %v166 = vmax.f32 %v163, 0.0
    %v167 = vld [vmem:[#allocation7] sm:$0xff]
    %v168 = vld [vmem:[#allocation7 + $0x8] sm:$0xff]
    %v169 = vld [vmem:[#allocation7 + $0x10] sm:$0xff]
    %v170 = vld [vmem:[#allocation7 + $0x18] sm:$0xff]
    %v171 = vld [vmem:[#allocation7 + $0x20] sm:$0xff]
    %v172 = vld [vmem:[#allocation7 + $0x28] sm:$0xff]
    %v173 = vld [vmem:[#allocation7 + $0x30] sm:$0xff]
    %v174 = vld [vmem:[#allocation7 + $0x38] sm:$0xff]
    %v175 = vld [vmem:[#allocation7 + $0x40] sm:$0xff]
    %v176 = vld [vmem:[#allocation7 + $0x48] sm:$0xff]
    %v177 = vld [vmem:[#allocation7 + $0x50] sm:$0xff]
    %v178 = vld [vmem:[#allocation7 + $0x58] sm:$0xff]
    %v179 = vld [vmem:[#allocation7 + $0x60] sm:$0xff]
    %v180 = vld [vmem:[#allocation7 + $0x68] sm:$0xff]
    %v181 = vld [vmem:[#allocation7 + $0x70] sm:$0xff]
    %v182 = vld [vmem:[#allocation7 + $0x78] sm:$0xff]
    %v183 = vld [vmem:[#allocation7 + $0x80] sm:$0xff]
    %v184 = vld [vmem:[#allocation7 + $0x88] sm:$0xff]
    %v185 = vld [vmem:[#allocation7 + $0x90] sm:$0xff]
    %v186 = vld [vmem:[#allocation7 + $0x98] sm:$0xff]
    %v187 = vld [vmem:[#allocation7 + $0xa0] sm:$0xff]
    %v188 = vld [vmem:[#allocation7 + $0xa8] sm:$0xff]
    %v189 = vld [vmem:[#allocation7 + $0xb0] sm:$0xff]
    %v190 = vld [vmem:[#allocation7 + $0xb8] sm:$0xff]
    %v191 = vld [vmem:[#allocation7 + $0xc0] sm:$0xff]
    %v192 = vld [vmem:[#allocation7 + $0xc8] sm:$0xff]
    %v193 = vld [vmem:[#allocation7 + $0xd0] sm:$0xff]
    %v194 = vld [vmem:[#allocation7 + $0xd8] sm:$0xff]
    %v195 = vld [vmem:[#allocation7 + $0xe0] sm:$0xff]
    %v196 = vld [vmem:[#allocation7 + $0xe8] sm:$0xff]
    %v197 = vld [vmem:[#allocation7 + $0xf0] sm:$0xff]
    %v198 = vld [vmem:[#allocation7 + $0xf8] sm:$0xff]
    %v199 = vld [vmem:[%s4] sm:$0x3]
    %v201 = vlaneseq
    %v202 = vshrl.u32 %v201, 7
    %v203 = vsub.s32 0, %v202
    %v204 = vrot.slane %v199, %v203
    %v205 = vlaneseq
    %v206 = vshrl.u32 %v205, 7
    %v207 = vsub.s32 1, %v206
    %v208 = vrot.slane %v199, %v207
    %211 = vmatprep.subr.mxu0 %v198
    %212 = vmatpush1.msra.mxu0 %v197
    %213 = vmatprep.subr.mxu0 %v196
    %214 = vmatpush1.msra.mxu0 %v195
    %215 = vmatprep.subr.mxu0 %v194
    %216 = vmatpush1.msra.mxu0 %v193
    %217 = vmatprep.subr.mxu0 %v192
    %218 = vmatpush1.msra.mxu0 %v191
    %219 = vmatprep.subr.mxu0 %v190
    %220 = vmatpush1.msra.mxu0 %v189
    %221 = vmatprep.subr.mxu0 %v188
    %222 = vmatpush1.msra.mxu0 %v187
    %223 = vmatprep.subr.mxu0 %v186
    %224 = vmatpush1.msra.mxu0 %v185
    %225 = vmatprep.subr.mxu0 %v184
    %226 = vmatpush1.msra.mxu0 %v183
    %227 = vmatprep.subr.mxu0 %v182
    %228 = vmatpush1.msra.mxu0 %v181
    %229 = vmatprep.subr.mxu0 %v180
    %230 = vmatpush1.msra.mxu0 %v179
    %231 = vmatprep.subr.mxu0 %v178
    %232 = vmatpush1.msra.mxu0 %v177
    %233 = vmatprep.subr.mxu0 %v176
    %234 = vmatpush1.msra.mxu0 %v175
    %235 = vmatprep.subr.mxu0 %v174
    %236 = vmatpush1.msra.mxu0 %v173
    %237 = vmatprep.subr.mxu0 %v172
    %238 = vmatpush1.msra.mxu0 %v171
    %239 = vmatprep.subr.mxu0 %v170
    %240 = vmatpush1.msra.mxu0 %v169
    %241 = vmatprep.subr.mxu0 %v168
    %242 = vmatpush1.msra.mxu0 %v167
    %243 = vmatprep.subr.mxu0 0.0
    %244 = vmatpush2.msra.mxu0 0.0
    %245 = vmatprep.subr.mxu0 0.0
    %246 = vmatpush2.msra.mxu0 0.0
    %247 = vmatprep.subr.mxu0 0.0
    %248 = vmatpush2.msra.mxu0 0.0
    %249 = vmatprep.subr.mxu0 0.0
    %250 = vmatpush2.msra.mxu0 0.0
    %251 = vmatprep.subr.mxu0 0.0
    %252 = vmatpush2.msra.mxu0 0.0
    %253 = vmatprep.subr.mxu0 0.0
    %254 = vmatpush2.msra.mxu0 0.0
    %255 = vmatprep.subr.mxu0 0.0
    %256 = vmatpush2.msra.mxu0 0.0
    %257 = vmatprep.subr.mxu0 0.0
    %258 = vmatpush2.msra.mxu0 0.0
    %259 = vmatprep.subr.mxu0 0.0
    %260 = vmatpush2.msra.mxu0 0.0
    %261 = vmatprep.subr.mxu0 0.0
    %262 = vmatpush2.msra.mxu0 0.0
    %263 = vmatprep.subr.mxu0 0.0
    %264 = vmatpush2.msra.mxu0 0.0
    %265 = vmatprep.subr.mxu0 0.0
    %266 = vmatpush2.msra.mxu0 0.0
    %267 = vmatprep.subr.mxu0 0.0
    %268 = vmatpush2.msra.mxu0 0.0
    %269 = vmatprep.subr.mxu0 0.0
    %270 = vmatpush2.msra.mxu0 0.0
    %271 = vmatprep.subr.mxu0 0.0
    %272 = vmatpush2.msra.mxu0 0.0
    %273 = vmatprep.subr.mxu0 0.0
    %274 = vmatpush2.msra.mxu0 0.0
    %275 = vmatprep.mubr.f32.mxu0 0.0
    %276 = vmatmul.mubr.f32.gmra.mxu0 %v166
    %v277 = vpop.f32.mrf.mxu0
    %v278 = vadd.f32 %v204, %v277
    %v279 = vpop.f32.mrf.mxu0
    %v280 = vadd.f32 %v208, %v279
    %281 = vdwg.mxu0
    %v282 = vmax.f32 %v278, 0.0
    %v283 = vmax.f32 %v280, 0.0
    %v284 = vld [vmem:[#allocation8] sm:$0xff]
    %v285 = vld [vmem:[#allocation8 + $0x8] sm:$0xff]
    %v286 = vld [vmem:[#allocation8 + $0x10] sm:$0xff]
    %v287 = vld [vmem:[#allocation8 + $0x18] sm:$0xff]
    %v288 = vld [vmem:[#allocation8 + $0x20] sm:$0xff]
    %v289 = vld [vmem:[#allocation8 + $0x28] sm:$0xff]
    %v290 = vld [vmem:[#allocation8 + $0x30] sm:$0xff]
    %v291 = vld [vmem:[#allocation8 + $0x38] sm:$0xff]
    %v292 = vld [vmem:[#allocation8 + $0x40] sm:$0xff]
    %v293 = vld [vmem:[#allocation8 + $0x48] sm:$0xff]
    %v294 = vld [vmem:[#allocation8 + $0x50] sm:$0xff]
    %v295 = vld [vmem:[#allocation8 + $0x58] sm:$0xff]
    %v296 = vld [vmem:[#allocation8 + $0x60] sm:$0xff]
    %v297 = vld [vmem:[#allocation8 + $0x68] sm:$0xff]
    %v298 = vld [vmem:[#allocation8 + $0x70] sm:$0xff]
    %v299 = vld [vmem:[#allocation8 + $0x78] sm:$0xff]
    %v300 = vld [vmem:[#allocation8 + $0x80] sm:$0xff]
    %v301 = vld [vmem:[#allocation8 + $0x88] sm:$0xff]
    %v302 = vld [vmem:[#allocation8 + $0x90] sm:$0xff]
    %v303 = vld [vmem:[#allocation8 + $0x98] sm:$0xff]
    %v304 = vld [vmem:[#allocation8 + $0xa0] sm:$0xff]
    %v305 = vld [vmem:[#allocation8 + $0xa8] sm:$0xff]
    %v306 = vld [vmem:[#allocation8 + $0xb0] sm:$0xff]
    %v307 = vld [vmem:[#allocation8 + $0xb8] sm:$0xff]
    %v308 = vld [vmem:[#allocation8 + $0xc0] sm:$0xff]
    %v309 = vld [vmem:[#allocation8 + $0xc8] sm:$0xff]
    %v310 = vld [vmem:[#allocation8 + $0xd0] sm:$0xff]
    %v311 = vld [vmem:[#allocation8 + $0xd8] sm:$0xff]
    %v312 = vld [vmem:[#allocation8 + $0xe0] sm:$0xff]
    %v313 = vld [vmem:[#allocation8 + $0xe8] sm:$0xff]
    %v314 = vld [vmem:[#allocation8 + $0xf0] sm:$0xff]
    %v315 = vld [vmem:[#allocation8 + $0xf8] sm:$0xff]
    %v316 = vld [vmem:[%s6] sm:$0x1]
    %v318 = vlaneseq
    %v319 = vshrl.u32 %v318, 7
    %v320 = vsub.s32 0, %v319
    %v321 = vrot.slane %v316, %v320
    %323 = vmatprep.subr.mxu0 0.0
    %324 = vmatpush1.msra.mxu0 %v299
    %325 = vmatprep.subr.mxu0 0.0
    %326 = vmatpush1.msra.mxu0 %v298
    %327 = vmatprep.subr.mxu0 0.0
    %328 = vmatpush1.msra.mxu0 %v297
    %329 = vmatprep.subr.mxu0 0.0
    %330 = vmatpush1.msra.mxu0 %v296
    %331 = vmatprep.subr.mxu0 0.0
    %332 = vmatpush1.msra.mxu0 %v295
    %333 = vmatprep.subr.mxu0 0.0
    %334 = vmatpush1.msra.mxu0 %v294
    %335 = vmatprep.subr.mxu0 0.0
    %336 = vmatpush1.msra.mxu0 %v293
    %337 = vmatprep.subr.mxu0 0.0
    %338 = vmatpush1.msra.mxu0 %v292
    %339 = vmatprep.subr.mxu0 0.0
    %340 = vmatpush1.msra.mxu0 %v291
    %341 = vmatprep.subr.mxu0 0.0
    %342 = vmatpush1.msra.mxu0 %v290
    %343 = vmatprep.subr.mxu0 0.0
    %344 = vmatpush1.msra.mxu0 %v289
    %345 = vmatprep.subr.mxu0 0.0
    %346 = vmatpush1.msra.mxu0 %v288
    %347 = vmatprep.subr.mxu0 0.0
    %348 = vmatpush1.msra.mxu0 %v287
    %349 = vmatprep.subr.mxu0 0.0
    %350 = vmatpush1.msra.mxu0 %v286
    %351 = vmatprep.subr.mxu0 0.0
    %352 = vmatpush1.msra.mxu0 %v285
    %353 = vmatprep.subr.mxu0 0.0
    %354 = vmatpush1.msra.mxu0 %v284
    %355 = vmatprep.subr.mxu0 0.0
    %356 = vmatpush2.msra.mxu0 %v315
    %357 = vmatprep.subr.mxu0 0.0
    %358 = vmatpush2.msra.mxu0 %v314
    %359 = vmatprep.subr.mxu0 0.0
    %360 = vmatpush2.msra.mxu0 %v313
    %361 = vmatprep.subr.mxu0 0.0
    %362 = vmatpush2.msra.mxu0 %v312
    %363 = vmatprep.subr.mxu0 0.0
    %364 = vmatpush2.msra.mxu0 %v311
    %365 = vmatprep.subr.mxu0 0.0
    %366 = vmatpush2.msra.mxu0 %v310
    %367 = vmatprep.subr.mxu0 0.0
    %368 = vmatpush2.msra.mxu0 %v309
    %369 = vmatprep.subr.mxu0 0.0
    %370 = vmatpush2.msra.mxu0 %v308
    %371 = vmatprep.subr.mxu0 0.0
    %372 = vmatpush2.msra.mxu0 %v307
    %373 = vmatprep.subr.mxu0 0.0
    %374 = vmatpush2.msra.mxu0 %v306
    %375 = vmatprep.subr.mxu0 0.0
    %376 = vmatpush2.msra.mxu0 %v305
    %377 = vmatprep.subr.mxu0 0.0
    %378 = vmatpush2.msra.mxu0 %v304
    %379 = vmatprep.subr.mxu0 0.0
    %380 = vmatpush2.msra.mxu0 %v303
    %381 = vmatprep.subr.mxu0 0.0
    %382 = vmatpush2.msra.mxu0 %v302
    %383 = vmatprep.subr.mxu0 0.0
    %384 = vmatpush2.msra.mxu0 %v301
    %385 = vmatprep.subr.mxu0 0.0
    %386 = vmatpush2.msra.mxu0 %v300
    %387 = vmatprep.mubr.f32.mxu0 %v283
    %388 = vmatmul.mubr.f32.gmra.mxu0 %v282
    %v389 = vpop.f32.mrf.mxu0
    %v390 = vadd.f32 %v321, %v389
    %v391 = vpop.f32.mrf.mxu0
    %392 = vdwg.mxu0
    %393 = vst [vmem:[#allocation10] sm:$0xff] %v390
    // Predicated region
    $region46: #{tpu_custom_call.1} parent=1 // pred_check
      _
    $region47: #{tpu_custom_call.1} parent=1 // pred_check_branch
      %395 = sbr.rel (0) target = $region49
    $region48: #{tpu_custom_call.1} parent=1 // pred_region
      %s397 = ssub.s32 128, 128
      %398 = vsyncadd [#allocation4], %s397
      %s400 = sshll.u32 [#allocation10], 4
      %s401 = int_to_ptr.vmem [resolvable:$true] %s400
      %403 = dma.vmem_to_hbm [thread:$0]  %s401, 128, %s7, [#allocation4]
    $region49: #{tpu_custom_call.1} parent=1 // pred_fallthru
      _
    // Predicated region
    $region50: #{tpu_custom_call.1} parent=1 // pred_check
      _
    $region51: #{tpu_custom_call.1} parent=1 // pred_check_branch
      %405 = sbr.rel (0) target = $region53
    $region52: #{tpu_custom_call.1} parent=1 // pred_region
      %406 = dma.done [#allocation4], 128
    $region53: #{tpu_custom_call.1} parent=1 // pred_fallthru
      _
    %407 = vsyncpa [#allocation3], 1
    %408 = vsyncpa [#allocation6], 1
    %409 = vsyncpa [#allocation9], 1
    %410 = vsyncpa [#allocation4], 1

</llo_original>
